<compile_context>
chip_gen: v5e
topology: v5e:2x2
jax: 0.10.0
libtpu: 0.0.40
codegen_flags: <defaults>
</compile_context>

<pallas_src>
import math

import jax
import jax.numpy as jnp
from jax import lax
from jax.experimental import pallas as pl
from jax.experimental.pallas import tpu as pltpu


# ----------------------------- configuration ------------------------------ #
C_IN = 4          # image channels
H = W = 16        # spatial size
HW = H * W        # 256
C_BB = 16         # backbone output channels (real)
C_BB_AUG = 32     # + 1 constant-one channel (kv-bias fold) + zero padding
D = 32            # queries_dim (= neck output channels)
NUM_QUERIES = 8
NUM_QUERY_H = 2
NUM_QUERY_W = NUM_QUERIES // NUM_QUERY_H
NUM_CLASSES = 4
FFN_DIM = 64

PATCH_K = C_IN * 9            # 36 (3x3 conv contraction, (c, ky, kx) order)
BIAS_LANE = PATCH_K           # ones row of patchesT (b_bb fold)
PT_ROWS = 128                 # lane-padded contraction dim of the backbone mm

# w_all bf16 slab [192, 128], row-stacked, every block 16-row aligned
W_BB_R0 = 0                   # rows   0: 32  backbone   [C_bb_aug, 128]
W_KV_R0 = 32                  # rows  32: 96  folded K|V [2D, lanes 0:C_bb_aug]
W_QP_R0 = 96                  # rows  96:128  wq | w1 | (wcls|wbox)
W_W2_R0 = 128                 # rows 128:192  w2         [FFN, lanes 0:D]
W_ROWS = 192
W_HEAD_LANE = 96              # lane offset of the fused cls|box head weights

# qin f32 slab [2*Nq, 128]
#   rows 0:Nq   : qpos(0:32) | ref_pts(32:36) | 0 | mask bcast(64:96) | 0
#   rows Nq:2Nq : row 0 = b1(0:64), row 1 = b2(0:32), row 2 = b_cls|b_box(0:8)
MASK_LANE0 = 64
QIN_COLS = 128

# packed output slab [Nq, 128]: logits | coords | hs | zeros
OUT_LOGITS_OFF = 0
OUT_COORDS_OFF = NUM_CLASSES
OUT_HS_OFF = NUM_CLASSES + 4
OUT_COLS = 128
OUT_PAD = OUT_COLS - (OUT_HS_OFF + D)   # 88


# ------------------------------ Pallas kernel ------------------------------ #
def _motr_kernel(patches_ref, qin_ref, w_ref, out_ref):
    """Fused backbone(3x3 conv) + ReLU + (neck folded into) decoder head."""
    f32 = jnp.float32
    bf16 = jnp.bfloat16
    nq = NUM_QUERIES

    # ---- query-side packed inputs (all lane-0-aligned views) ----
    qpos = qin_ref[0:nq, 0:D]                                 # [Nq, D]   f32
    refp = qin_ref[0:nq, D:D + 4]                             # [Nq, 4]
    mask = qin_ref[0:nq, MASK_LANE0:MASK_LANE0 + D]           # [Nq, D] pre-bcast
    b_1 = qin_ref[nq + 0:nq + 1, 0:FFN_DIM]                   # [1, FFN]
    b_2 = qin_ref[nq + 1:nq + 2, 0:D]                         # [1, D]
    b_hd = qin_ref[nq + 2:nq + 3, 0:NUM_CLASSES + 4]          # [1, 8]

    # ---- backbone 3x3 conv (im2col, transposed / lane-dense) + ReLU ----
    # b_bb folded via the ones row of patchesT; channel C_BB is a constant-one
    # channel used to fold the K/V bias into the next matmul.
    xT = jnp.dot(w_ref[W_BB_R0:W_BB_R0 + C_BB_AUG, :], patches_ref[...],
                 preferred_element_type=f32)                  # [C_bb_aug, HW]
    xT = jnp.maximum(xT, 0.0).astype(bf16)                    # ReLU(1) == 1

    # ---- neck folded into K/V; K/V bias folded via constant-one channel ----
    kvT = jnp.dot(w_ref[W_KV_R0:W_KV_R0 + 2 * D, 0:C_BB_AUG], xT,
                  preferred_element_type=f32)                 # [2D, HW]
    kv_bf = kvT.astype(bf16)
    kT = kv_bf[0:D, :]                                        # [D, HW]
    vT = kv_bf[D:2 * D, :]                                    # [D, HW]

    # ---- cross attention: queries attend to the feature map ----
    wqp = w_ref[W_QP_R0:W_QP_R0 + D, :]                       # [D, 128] bf16
    # 1/sqrt(D) pre-folded into wq at pack time.
    q = jnp.dot(qpos.astype(bf16), wqp[:, 0:D],
                preferred_element_type=f32)                   # [Nq, D]
    scores = jnp.dot(q.astype(bf16), kT,
                     preferred_element_type=f32)              # [Nq, HW]
    scores = scores - jnp.max(scores, axis=-1, keepdims=True)
    p = jnp.exp(scores)
    attn = p * pl.reciprocal(jnp.sum(p, axis=-1, keepdims=True), approx=True)
    # minor-dim contraction on the small [D, HW] operand (per review).
    ctx = lax.dot_general(attn.astype(bf16), vT,
                          dimension_numbers=(((1,), (1,)), ((), ())),
                          preferred_element_type=f32)         # [Nq, D]

    hs = ctx + qpos                                           # residual (f32)

    # ---- FFN + residual ----
    h1 = jnp.maximum(
        jnp.dot(hs.astype(bf16), wqp[:, D:D + FFN_DIM],
                preferred_element_type=f32) + b_1, 0.0)       # [Nq, FFN]
    hs = jnp.dot(h1.astype(bf16), w_ref[W_W2_R0:W_W2_R0 + FFN_DIM, 0:D],
                 preferred_element_type=f32) + b_2 + hs       # [Nq, D]

    # mask_query zeroes padded (fake) track queries.
    # TODO(synk): masking is applied to hs before the heads (so masked queries
    # still emit head-bias logits/coords) — matches the previous synthetic head.
    hs = hs * mask

    # ---- fused class | box head: one [Nq, D] @ [D, 8] matmul ----
    head = jnp.dot(hs.astype(bf16), wqp[:, W_HEAD_LANE:W_HEAD_LANE + 8],
                   preferred_element_type=f32) + b_hd         # [Nq, 8]
    logits = head[:, 0:NUM_CLASSES]
    # TODO(synk): real MOTR adds inverse_sigmoid(ref_pts); synthetic head adds
    # raw ref_pts pre-sigmoid (as in the previous version).
    coords = 1.0 / (1.0 + jnp.exp(-(head[:, NUM_CLASSES:NUM_CLASSES + 4] + refp)))

    # single lane-dense packed output slab -> one unmasked store / one DMA
    out_ref[...] = jnp.concatenate(
        [logits, coords, hs, jnp.zeros((nq, OUT_PAD), f32)], axis=-1)


_VMEM = pl.BlockSpec(memory_space=pltpu.MemorySpace.VMEM)


def _motr_pallas(patchesT, qin, w_all):
    return pl.pallas_call(
        _motr_kernel,
        out_shape=jax.ShapeDtypeStruct((NUM_QUERIES, OUT_COLS), jnp.float32),
        in_specs=[_VMEM, _VMEM, _VMEM],
        out_specs=_VMEM,
    )(patchesT, qin, w_all)


# -------------------------------- parameters ------------------------------- #
def init_params(key):
    ks = jax.random.split(key, 12)

    def w(k, shape, scale=0.05):
        return (scale * jax.random.normal(k, shape)).astype(jnp.float32)

    return {
        # backbone 3x3 conv weight flattened to [C_in*9, C_bb] ((c,ky,kx) order)
        "w_bb": w(ks[0], (PATCH_K, C_BB)),
        "b_bb": w(ks[1], (1, C_BB)),
        # neck 1x1 conv
        "w_nk": w(ks[2], (C_BB, D)),
        "b_nk": w(ks[3], (1, D)),
        # head
        "wq": w(ks[4], (D, D)),
        "wk": w(ks[5], (D, D)),
        "wv": w(ks[6], (D, D)),
        "w1": w(ks[7], (D, FFN_DIM)),
        "b1": w(ks[8], (1, FFN_DIM)),
        "w2": w(ks[9], (FFN_DIM, D)),
        "b2": jnp.zeros((1, D), jnp.float32),
        "wcls": w(ks[10], (D, NUM_CLASSES)),
        "bcls": jnp.zeros((1, NUM_CLASSES), jnp.float32),
        "wbox": w(ks[11], (D, 4)),
        "bbox": jnp.zeros((1, 4), jnp.float32),
    }


def pack_params(params):
    """Fold neck/biases/scale into one bf16 weight slab + one f32 bias-row slab."""
    f32 = jnp.float32

    # fold neck 1x1 conv into the K / V projections:
    #   k = (x@w_nk + b_nk) @ wk = x @ (w_nk@wk) + b_nk@wk
    wk_f = params["w_nk"] @ params["wk"]                      # [C_BB, D]
    wv_f = params["w_nk"] @ params["wv"]
    bk_f = params["b_nk"] @ params["wk"]                      # [1, D]
    bv_f = params["b_nk"] @ params["wv"]

    w_all = jnp.zeros((W_ROWS, 128), f32)

    # backbone block (transposed): rows 0:C_BB real channels, row C_BB is the
    # constant-one channel (weight 0, "bias" 1 via the ones row of patchesT).
    w_bbT = params["w_bb"].T                                  # [C_BB, 36]
    w_all = w_all.at[W_BB_R0:W_BB_R0 + C_BB, 0:PATCH_K].set(w_bbT)
    w_all = w_all.at[W_BB_R0:W_BB_R0 + C_BB, BIAS_LANE].set(params["b_bb"][0])
    w_all = w_all.at[W_BB_R0 + C_BB, BIAS_LANE].set(1.0)

    # K|V block (transposed): lanes 0:C_BB real, lane C_BB = folded bias column.
    w_kvT = jnp.concatenate([wk_f, wv_f], axis=1).T           # [2D, C_BB]
    b_kv = jnp.concatenate([bk_f, bv_f], axis=1)[0]           # [2D]
    w_all = w_all.at[W_KV_R0:W_KV_R0 + 2 * D, 0:C_BB].set(w_kvT)
    w_all = w_all.at[W_KV_R0:W_KV_R0 + 2 * D, C_BB].set(b_kv)

    # query-side block: wq (pre-scaled) | w1 | fused (wcls|wbox)
    w_all = w_all.at[W_QP_R0:W_QP_R0 + D, 0:D].set(
        params["wq"] / math.sqrt(D))
    w_all = w_all.at[W_QP_R0:W_QP_R0 + D, D:D + FFN_DIM].set(params["w1"])
    w_head = jnp.concatenate([params["wcls"], params["wbox"]], axis=1)  # [D, 8]
    w_all = w_all.at[W_QP_R0:W_QP_R0 + D,
                     W_HEAD_LANE:W_HEAD_LANE + NUM_CLASSES + 4].set(w_head)

    # w2 block
    w_all = w_all.at[W_W2_R0:W_W2_R0 + FFN_DIM, 0:D].set(params["w2"])

    # f32 query-side bias rows (appended to qin in the wrapper): each starts at
    # lane 0 -> cheap row views, no lane extracts in-kernel.
    bias_rows = jnp.zeros((NUM_QUERIES, QIN_COLS), f32)
    bias_rows = bias_rows.at[0, 0:FFN_DIM].set(params["b1"][0])
    bias_rows = bias_rows.at[1, 0:D].set(params["b2"][0])
    b_head = jnp.concatenate([params["bcls"], params["bbox"]], axis=1)[0]
    bias_rows = bias_rows.at[2, 0:NUM_CLASSES + 4].set(b_head)

    return {
        "w_all": w_all.astype(jnp.bfloat16),   # [192, 128] bf16
        "bias_rows": bias_rows,                # [Nq, 128]  f32
    }


# -------------------------------- glue (JAX) ------------------------------- #
@jax.jit
def motr_forward(img, query_pos, ref_pts, mask_query, packed):
    """Motr.forward with compile_motr=True semantics.

    img        : [1, C, H, W]  (NCHW)
    query_pos  : [1, D, num_query_h, num_query_w]
    ref_pts    : [1, 4, num_query_h, num_query_w]
    mask_query : [1, 1, 1, num_queries]
    returns (outputs_classes[-1] [1,Nq,num_classes],
             outputs_coords[-1]  [1,Nq,4],
             out_hs              [1,Nq,D])
    """
    f32 = jnp.float32

    # ---- im2col built straight into the transposed [PT_ROWS, HW] kernel
    # layout; row PATCH_K is ones (b_bb homogeneous fold), rest zero-padded.
    img_chw = img[0]
    padded = jnp.pad(img_chw, ((0, 0), (1, 1), (1, 1)))
    taps = [padded[:, dy:dy + H, dx:dx + W]
            for dy in range(3) for dx in range(3)]            # 9 x [C, H, W]
    pt = jnp.stack(taps, axis=1).reshape(PATCH_K, HW)         # [36, HW]
    patchesT = jnp.concatenate(
        [pt, jnp.ones((1, HW), f32),
         jnp.zeros((PT_ROWS - PATCH_K - 1, HW), f32)], axis=0)
    patchesT = patchesT.astype(jnp.bfloat16)                  # [128, HW]

    # ---- undo Motr's query packing, pack one lane-dense qin slab ----
    nq = NUM_QUERIES
    qpos = query_pos.reshape(D, nq).T                         # [Nq, D]
    refp = ref_pts.reshape(4, nq).T                           # [Nq, 4]
    mask = mask_query.reshape(nq, 1)                          # [Nq, 1]
    row_q = jnp.concatenate(
        [qpos, refp, jnp.zeros((nq, MASK_LANE0 - D - 4), f32),
         jnp.broadcast_to(mask, (nq, D)),
         jnp.zeros((nq, QIN_COLS - MASK_LANE0 - D), f32)], axis=1)   # [Nq, 128]
    qin = jnp.concatenate([row_q, packed["bias_rows"]], axis=0)      # [2Nq, 128]

    # ---- single fused Pallas kernel (3 input DMAs, 1 output DMA) ----
    out = _motr_pallas(patchesT, qin, packed["w_all"])        # [Nq, 128]
    logits = out[:, OUT_LOGITS_OFF:OUT_LOGITS_OFF + NUM_CLASSES]
    coords = out[:, OUT_COORDS_OFF:OUT_COORDS_OFF + 4]
    hs = out[:, OUT_HS_OFF:OUT_HS_OFF + D]

    return logits[None], coords[None], hs[None]


# ---------------------------------- main ----------------------------------- #
if __name__ == "__main__":
    key = jax.random.PRNGKey(0)
    k_img, k_q, k_r, k_p = jax.random.split(key, 4)

    params = init_params(k_p)
    packed = pack_params(params)

    img = jax.random.normal(k_img, (1, C_IN, H, W), dtype=jnp.float32)
    # query_embed.weight [Nq, D], refpoint_embed.weight [Nq, 4]
    query_embed = 0.1 * jax.random.normal(k_q, (NUM_QUERIES, D), dtype=jnp.float32)
    refpoint_embed = 0.1 * jax.random.normal(k_r, (NUM_QUERIES, 4), dtype=jnp.float32)

    # pack exactly as Motr._prepare_single_image_forward does
    query_pos = query_embed.T.reshape(1, D, NUM_QUERY_H, NUM_QUERY_W)
    ref_pts = refpoint_embed.T.reshape(1, 4, NUM_QUERY_H, NUM_QUERY_W)
    mask_query = jnp.ones((1, 1, 1, NUM_QUERIES), dtype=jnp.float32)

    out_cls, out_coords, out_hs = motr_forward(img, query_pos, ref_pts,
                                               mask_query, packed)
    jax.block_until_ready((out_cls, out_coords, out_hs))

    assert out_cls.shape == (1, NUM_QUERIES, NUM_CLASSES)
    assert out_coords.shape == (1, NUM_QUERIES, 4)
    assert out_hs.shape == (1, NUM_QUERIES, D)
    assert bool(jnp.all(jnp.isfinite(out_cls)))
    assert bool(jnp.all(jnp.isfinite(out_hs)))
    assert bool(jnp.all((out_coords >= 0.0) & (out_coords <= 1.0)))

    print("KERNEL_OK")
</pallas_src>

<mosaic_0001>
module attributes {stable_mosaic.version = 11 : i64} {
  func.func @_motr_kernel(%arg0: memref<128x256xbf16, #tpu.memory_space<vmem>>, %arg1: memref<16x128xf32, #tpu.memory_space<vmem>>, %arg2: memref<192x128xbf16, #tpu.memory_space<vmem>>, %arg3: memref<8x128xf32, #tpu.memory_space<vmem>>) attributes {dimension_semantics = [], scalar_prefetch = 0 : i64, scratch_operands = 0 : i64, tpu.core_type = #tpu.core_type<tc>} {
    %c0 = arith.constant 0 : index
    %c0_0 = arith.constant 0 : index
    %0 = vector.load %arg1[%c0, %c0_0] : memref<16x128xf32, #tpu.memory_space<vmem>>, vector<8x32xf32>
    %c0_1 = arith.constant 0 : index
    %c32 = arith.constant 32 : index
    %1 = vector.load %arg1[%c0_1, %c32] : memref<16x128xf32, #tpu.memory_space<vmem>>, vector<8x4xf32>
    %c0_2 = arith.constant 0 : index
    %c64 = arith.constant 64 : index
    %2 = vector.load %arg1[%c0_2, %c64] : memref<16x128xf32, #tpu.memory_space<vmem>>, vector<8x32xf32>
    %c8 = arith.constant 8 : index
    %c0_3 = arith.constant 0 : index
    %3 = vector.load %arg1[%c8, %c0_3] : memref<16x128xf32, #tpu.memory_space<vmem>>, vector<1x64xf32>
    %c9 = arith.constant 9 : index
    %c0_4 = arith.constant 0 : index
    %4 = vector.load %arg1[%c9, %c0_4] : memref<16x128xf32, #tpu.memory_space<vmem>>, vector<1x32xf32>
    %c10 = arith.constant 10 : index
    %c0_5 = arith.constant 0 : index
    %5 = vector.load %arg1[%c10, %c0_5] : memref<16x128xf32, #tpu.memory_space<vmem>>, vector<1x8xf32>
    %c0_6 = arith.constant 0 : index
    %c0_7 = arith.constant 0 : index
    %6 = vector.load %arg2[%c0_6, %c0_7] : memref<192x128xbf16, #tpu.memory_space<vmem>>, vector<32x128xbf16>
    %c0_8 = arith.constant 0 : index
    %c0_9 = arith.constant 0 : index
    %7 = vector.load %arg0[%c0_8, %c0_9] : memref<128x256xbf16, #tpu.memory_space<vmem>>, vector<128x256xbf16>
    %cst = arith.constant dense<0.000000e+00> : vector<32x256xf32>
    %8 = tpu.matmul %6, %7, %cst {dimension_numbers = #tpu.dot_dimension_numbers<[1], [0], [0], [1], [0, 0, 1, 1], [], []>} : vector<32x128xbf16>, vector<128x256xbf16>, vector<32x256xf32> -> vector<32x256xf32>
    %cst_10 = arith.constant 0.000000e+00 : f32
    %9 = vector.broadcast %cst_10 : f32 to vector<32x256xf32>
    %10 = arith.maximumf %8, %9 : vector<32x256xf32>
    %11 = arith.truncf %10 : vector<32x256xf32> to vector<32x256xbf16>
    %c32_11 = arith.constant 32 : index
    %c0_12 = arith.constant 0 : index
    %12 = vector.load %arg2[%c32_11, %c0_12] : memref<192x128xbf16, #tpu.memory_space<vmem>>, vector<64x32xbf16>
    %cst_13 = arith.constant dense<0.000000e+00> : vector<64x256xf32>
    %13 = tpu.matmul %12, %11, %cst_13 {dimension_numbers = #tpu.dot_dimension_numbers<[1], [0], [0], [1], [0, 0, 1, 1], [], []>} : vector<64x32xbf16>, vector<32x256xbf16>, vector<64x256xf32> -> vector<64x256xf32>
    %14 = arith.truncf %13 : vector<64x256xf32> to vector<64x256xbf16>
    %15 = vector.extract_strided_slice %14 {offsets = [0, 0], sizes = [32, 256], strides = [1, 1]} : vector<64x256xbf16> to vector<32x256xbf16>
    %16 = vector.extract_strided_slice %14 {offsets = [32, 0], sizes = [32, 256], strides = [1, 1]} : vector<64x256xbf16> to vector<32x256xbf16>
    %c96 = arith.constant 96 : index
    %c0_14 = arith.constant 0 : index
    %17 = vector.load %arg2[%c96, %c0_14] : memref<192x128xbf16, #tpu.memory_space<vmem>>, vector<32x128xbf16>
    %18 = arith.truncf %0 : vector<8x32xf32> to vector<8x32xbf16>
    %19 = vector.extract_strided_slice %17 {offsets = [0, 0], sizes = [32, 32], strides = [1, 1]} : vector<32x128xbf16> to vector<32x32xbf16>
    %cst_15 = arith.constant dense<0.000000e+00> : vector<8x32xf32>
    %20 = tpu.matmul %18, %19, %cst_15 {dimension_numbers = #tpu.dot_dimension_numbers<[1], [0], [0], [1], [0, 0, 1, 1], [], []>} : vector<8x32xbf16>, vector<32x32xbf16>, vector<8x32xf32> -> vector<8x32xf32>
    %21 = arith.truncf %20 : vector<8x32xf32> to vector<8x32xbf16>
    %cst_16 = arith.constant dense<0.000000e+00> : vector<8x256xf32>
    %22 = tpu.matmul %21, %15, %cst_16 {dimension_numbers = #tpu.dot_dimension_numbers<[1], [0], [0], [1], [0, 0, 1, 1], [], []>} : vector<8x32xbf16>, vector<32x256xbf16>, vector<8x256xf32> -> vector<8x256xf32>
    %cst_17 = arith.constant dense<0xFF800000> : vector<8xf32>
    %23 = vector.multi_reduction <maximumf>, %22, %cst_17 [1] : vector<8x256xf32> to vector<8xf32>
    %24 = vector.shape_cast %23 : vector<8xf32> to vector<8x1xf32>
    %25 = vector.broadcast %24 : vector<8x1xf32> to vector<8x256xf32>
    %26 = arith.subf %22, %25 : vector<8x256xf32>
    %27 = math.exp %26 : vector<8x256xf32>
    %cst_18 = arith.constant dense<0.000000e+00> : vector<8xf32>
    %28 = vector.multi_reduction <add>, %27, %cst_18 [1] : vector<8x256xf32> to vector<8xf32>
    %29 = vector.shape_cast %28 : vector<8xf32> to vector<8x1xf32>
    %30 = tpu.reciprocal %29 {approx = true} : vector<8x1xf32> -> vector<8x1xf32>
    %31 = vector.broadcast %30 : vector<8x1xf32> to vector<8x256xf32>
    %32 = arith.mulf %27, %31 : vector<8x256xf32>
    %33 = arith.truncf %32 : vector<8x256xf32> to vector<8x256xbf16>
    %cst_19 = arith.constant dense<0.000000e+00> : vector<8x32xf32>
    %34 = tpu.matmul %33, %16, %cst_19 {dimension_numbers = #tpu.dot_dimension_numbers<[1], [1], [0], [0], [0, 0, 1, 0], [], []>} : vector<8x256xbf16>, vector<32x256xbf16>, vector<8x32xf32> -> vector<8x32xf32>
    %35 = arith.addf %34, %0 : vector<8x32xf32>
    %36 = arith.truncf %35 : vector<8x32xf32> to vector<8x32xbf16>
    %37 = vector.extract_strided_slice %17 {offsets = [0, 32], sizes = [32, 64], strides = [1, 1]} : vector<32x128xbf16> to vector<32x64xbf16>
    %cst_20 = arith.constant dense<0.000000e+00> : vector<8x64xf32>
    %38 = tpu.matmul %36, %37, %cst_20 {dimension_numbers = #tpu.dot_dimension_numbers<[1], [0], [0], [1], [0, 0, 1, 1], [], []>} : vector<8x32xbf16>, vector<32x64xbf16>, vector<8x64xf32> -> vector<8x64xf32>
    %39 = vector.broadcast %3 : vector<1x64xf32> to vector<8x64xf32>
    %40 = arith.addf %38, %39 : vector<8x64xf32>
    %cst_21 = arith.constant 0.000000e+00 : f32
    %41 = vector.broadcast %cst_21 : f32 to vector<8x64xf32>
    %42 = arith.maximumf %40, %41 : vector<8x64xf32>
    %43 = arith.truncf %42 : vector<8x64xf32> to vector<8x64xbf16>
    %c128 = arith.constant 128 : index
    %c0_22 = arith.constant 0 : index
    %44 = vector.load %arg2[%c128, %c0_22] : memref<192x128xbf16, #tpu.memory_space<vmem>>, vector<64x32xbf16>
    %cst_23 = arith.constant dense<0.000000e+00> : vector<8x32xf32>
    %45 = tpu.matmul %43, %44, %cst_23 {dimension_numbers = #tpu.dot_dimension_numbers<[1], [0], [0], [1], [0, 0, 1, 1], [], []>} : vector<8x64xbf16>, vector<64x32xbf16>, vector<8x32xf32> -> vector<8x32xf32>
    %46 = vector.broadcast %4 : vector<1x32xf32> to vector<8x32xf32>
    %47 = arith.addf %45, %46 : vector<8x32xf32>
    %48 = arith.addf %47, %35 : vector<8x32xf32>
    %49 = arith.mulf %48, %2 : vector<8x32xf32>
    %50 = arith.truncf %49 : vector<8x32xf32> to vector<8x32xbf16>
    %51 = vector.extract_strided_slice %17 {offsets = [0, 96], sizes = [32, 8], strides = [1, 1]} : vector<32x128xbf16> to vector<32x8xbf16>
    %cst_24 = arith.constant dense<0.000000e+00> : vector<8x8xf32>
    %52 = tpu.matmul %50, %51, %cst_24 {dimension_numbers = #tpu.dot_dimension_numbers<[1], [0], [0], [1], [0, 0, 1, 1], [], []>} : vector<8x32xbf16>, vector<32x8xbf16>, vector<8x8xf32> -> vector<8x8xf32>
    %53 = vector.broadcast %5 : vector<1x8xf32> to vector<8x8xf32>
    %54 = arith.addf %52, %53 : vector<8x8xf32>
    %55 = vector.extract_strided_slice %54 {offsets = [0, 0], sizes = [8, 4], strides = [1, 1]} : vector<8x8xf32> to vector<8x4xf32>
    %56 = vector.extract_strided_slice %54 {offsets = [0, 4], sizes = [8, 4], strides = [1, 1]} : vector<8x8xf32> to vector<8x4xf32>
    %57 = arith.addf %56, %1 : vector<8x4xf32>
    %cst_25 = arith.constant 0.000000e+00 : f32
    %58 = vector.broadcast %cst_25 : f32 to vector<8x4xf32>
    %59 = arith.subf %58, %57 : vector<8x4xf32>
    %60 = math.exp %59 : vector<8x4xf32>
    %cst_26 = arith.constant 1.000000e+00 : f32
    %61 = vector.broadcast %cst_26 : f32 to vector<8x4xf32>
    %62 = arith.addf %61, %60 : vector<8x4xf32>
    %cst_27 = arith.constant 1.000000e+00 : f32
    %63 = vector.broadcast %cst_27 : f32 to vector<8x4xf32>
    %64 = arith.divf %63, %62 : vector<8x4xf32>
    %cst_28 = arith.constant 0.000000e+00 : f32
    %65 = vector.broadcast %cst_28 : f32 to vector<8x88xf32>
    %66 = tpu.concatenate %55, %64, %49, %65 in 1 : vector<8x4xf32>, vector<8x4xf32>, vector<8x32xf32>, vector<8x88xf32> -> vector<8x128xf32>
    %c0_29 = arith.constant 0 : index
    %c0_30 = arith.constant 0 : index
    %67 = vector.load %arg3[%c0_29, %c0_30] : memref<8x128xf32, #tpu.memory_space<vmem>>, vector<8x128xf32>
    tpu.vector_store %arg3[%c0_29, %c0_30], %66 {strides = array<i32>} : memref<8x128xf32, #tpu.memory_space<vmem>>, vector<8x128xf32>,
    return
  }
}

</mosaic_0001>

<llo_original>
// kernel: motr_forward.1
$region0: #{motr_forward.1}
  #allocation0 [shape = 'u32[]', space=smem, size = 0x4, offset = 0x4, fixed_abs, tag = 'smem constant byte address 0x4 - core index']
  #allocation1 [shape = 'u32[72,128]{1,0:T(1,128)}', space=vmem, size = 0x9000, scoped, tag = 'internal scratch']
  %s0 = inlined_call_operand.vmem [shape: bf16[128,256], index: 0, kind: input, shape index: {}]
  %s1 = inlined_call_operand.vmem [shape: f32[16,128], index: 1, kind: input, shape index: {}]
  %s2 = inlined_call_operand.vmem [shape: bf16[192,128], index: 2, kind: input, shape index: {}]
  %s3 = inlined_call_operand.vmem [shape: f32[8,128], index: 3, kind: output, shape index: {}]
  %s4 = sld [smem:[#allocation0]]
  $region22: #{motr_forward.1} parent=0
    _
  %s6 = ssub.s32 1, %s4
  %s7 = scalar_select 0, %s6, %s4
  // Predicated region
  $region2: #{motr_forward.1} parent=0 // pred_check
    _
  $region3: #{motr_forward.1} parent=0 // pred_check_branch
    %9 = sbr.rel (0) target = $region5
  $region4: #{motr_forward.1} parent=0 // pred_region
    _
  $region5: #{motr_forward.1} parent=0 // pred_fallthru
    _
  // Predicated region
  $region6: #{motr_forward.1} parent=0 // pred_check
    _
  $region7: #{motr_forward.1} parent=0 // pred_check_branch
    %11 = sbr.rel (0) target = $region9
  $region8: #{motr_forward.1} parent=0 // pred_region
    _
  $region9: #{motr_forward.1} parent=0 // pred_fallthru
    _
  // Predicated region
  $region10: #{motr_forward.1} parent=0 // pred_check
    _
  $region11: #{motr_forward.1} parent=0 // pred_check_branch
    %13 = sbr.rel (0) target = $region13
  $region12: #{motr_forward.1} parent=0 // pred_region
    _
  $region13: #{motr_forward.1} parent=0 // pred_fallthru
    _
  %v15 = vld [vmem:[%s1] sm:$0xff]
  %v16 = vld [vmem:[%s1 + $0x8] sm:$0x1]
  %v17 = vld [vmem:[%s1 + $0x9] sm:$0x1]
  %v18 = vld [vmem:[%s1 + $0xa] sm:$0x1]
  %v19 = vld [vmem:[%s2] sm:$0xf]
  %v20 = vld [vmem:[%s2 + $0x4] sm:$0xf]
  %v21 = vld [vmem:[%s2 + $0x8] sm:$0xf]
  %v22 = vld [vmem:[%s2 + $0xc] sm:$0xf]
  %v23 = vld [vmem:[%s0] sm:$0xff]
  %v24 = vld [vmem:[%s0 + $0x8] sm:$0xff]
  %v25 = vld [vmem:[%s0 + $0x10] sm:$0xff]
  %v26 = vld [vmem:[%s0 + $0x18] sm:$0xff]
  %v27 = vld [vmem:[%s0 + $0x20] sm:$0xff]
  %v28 = vld [vmem:[%s0 + $0x28] sm:$0xff]
  %v29 = vld [vmem:[%s0 + $0x30] sm:$0xff]
  %v30 = vld [vmem:[%s0 + $0x38] sm:$0xff]
  %v31 = vld [vmem:[%s0 + $0x40] sm:$0xff]
  %v32 = vld [vmem:[%s0 + $0x48] sm:$0xff]
  %v33 = vld [vmem:[%s0 + $0x50] sm:$0xff]
  %v34 = vld [vmem:[%s0 + $0x58] sm:$0xff]
  %v35 = vld [vmem:[%s0 + $0x60] sm:$0xff]
  %v36 = vld [vmem:[%s0 + $0x68] sm:$0xff]
  %v37 = vld [vmem:[%s0 + $0x70] sm:$0xff]
  %v38 = vld [vmem:[%s0 + $0x78] sm:$0xff]
  %v43 = vunpack.c.l.b16 %v19
  %v44 = vunpack.c.l.b16 %v20
  %v45 = vunpack.c.l.b16 %v21
  %v46 = vunpack.c.l.b16 %v22
  %v47 = vpack.c.b16 %v44, %v43
  %v48 = vpack.c.b16 %v46, %v45
  %v67 = vunpack.c.l.b16 %v23
  %v68 = vunpack.c.h.b16 %v23
  %v69 = vunpack.c.l.b16 %v24
  %v70 = vunpack.c.h.b16 %v24
  %v71 = vunpack.c.l.b16 %v25
  %v72 = vunpack.c.h.b16 %v25
  %v73 = vunpack.c.l.b16 %v26
  %v74 = vunpack.c.h.b16 %v26
  %v75 = vunpack.c.l.b16 %v27
  %v76 = vunpack.c.h.b16 %v27
  %v77 = vunpack.c.l.b16 %v28
  %v78 = vunpack.c.h.b16 %v28
  %v79 = vunpack.c.l.b16 %v29
  %v80 = vunpack.c.h.b16 %v29
  %v81 = vunpack.c.l.b16 %v30
  %v82 = vunpack.c.h.b16 %v30
  %v83 = vunpack.c.l.b16 %v31
  %v84 = vunpack.c.h.b16 %v31
  %v85 = vunpack.c.l.b16 %v32
  %v86 = vunpack.c.h.b16 %v32
  %v87 = vunpack.c.l.b16 %v33
  %v88 = vunpack.c.h.b16 %v33
  %v89 = vunpack.c.l.b16 %v34
  %v90 = vunpack.c.h.b16 %v34
  %v91 = vunpack.c.l.b16 %v35
  %v92 = vunpack.c.h.b16 %v35
  %v93 = vunpack.c.l.b16 %v36
  %v94 = vunpack.c.h.b16 %v36
  %v95 = vunpack.c.l.b16 %v37
  %v96 = vunpack.c.h.b16 %v37
  %v97 = vunpack.c.l.b16 %v38
  %v98 = vunpack.c.h.b16 %v38
  %v99 = vpack.c.b16 %v69, %v67
  %v100 = vpack.c.b16 %v70, %v68
  %v101 = vpack.c.b16 %v73, %v71
  %v102 = vpack.c.b16 %v74, %v72
  %v103 = vpack.c.b16 %v77, %v75
  %v104 = vpack.c.b16 %v78, %v76
  %v105 = vpack.c.b16 %v81, %v79
  %v106 = vpack.c.b16 %v82, %v80
  %v107 = vpack.c.b16 %v85, %v83
  %v108 = vpack.c.b16 %v86, %v84
  %v109 = vpack.c.b16 %v89, %v87
  %v110 = vpack.c.b16 %v90, %v88
  %v111 = vpack.c.b16 %v93, %v91
  %v112 = vpack.c.b16 %v94, %v92
  %v113 = vpack.c.b16 %v97, %v95
  %v114 = vpack.c.b16 %v98, %v96
  %131 = vmatpush.bf16.msra.mxu0 %v113
  %132 = vmatpush.bf16.msra.mxu0 %v111
  %133 = vmatpush.bf16.msra.mxu0 %v109
  %134 = vmatpush.bf16.msra.mxu0 %v107
  %135 = vmatpush.bf16.msra.mxu0 %v105
  %136 = vmatpush.bf16.msra.mxu0 %v103
  %137 = vmatpush.bf16.msra.mxu0 %v101
  %138 = vmatpush.bf16.msra.mxu0 %v99
  %139 = vmatmul.bf16.gmra.mxu0 %v47
  %v140 = vpop.f32.mrf.mxu0
  %v141 = vadd.f32 0.0, %v140
  %v142 = vpop.f32.mrf.mxu0
  %v143 = vadd.f32 0.0, %v142
  %144 = vmatmul.bf16.gmra.mxu0 %v48
  %v145 = vpop.f32.mrf.mxu0
  %v146 = vadd.f32 0.0, %v145
  %v147 = vpop.f32.mrf.mxu0
  %v148 = vadd.f32 0.0, %v147
  %149 = vdwg.mxu0
  %150 = vmatpush.bf16.msra.mxu0 %v114
  %151 = vmatpush.bf16.msra.mxu0 %v112
  %152 = vmatpush.bf16.msra.mxu0 %v110
  %153 = vmatpush.bf16.msra.mxu0 %v108
  %154 = vmatpush.bf16.msra.mxu0 %v106
  %155 = vmatpush.bf16.msra.mxu0 %v104
  %156 = vmatpush.bf16.msra.mxu0 %v102
  %157 = vmatpush.bf16.msra.mxu0 %v100
  %158 = vmatmul.bf16.gmra.mxu0 %v47
  %v159 = vpop.f32.mrf.mxu0
  %v160 = vadd.f32 0.0, %v159
  %v161 = vpop.f32.mrf.mxu0
  %v162 = vadd.f32 0.0, %v161
  %163 = vmatmul.bf16.gmra.mxu0 %v48
  %v164 = vpop.f32.mrf.mxu0
  %v165 = vadd.f32 0.0, %v164
  %v166 = vpop.f32.mrf.mxu0
  %v167 = vadd.f32 0.0, %v166
  %168 = vdwg.mxu0
  %v169 = vmax.f32 %v141, 0.0
  %v170 = vmax.f32 %v160, 0.0
  %v171 = vmax.f32 %v143, 0.0
  %v172 = vmax.f32 %v162, 0.0
  %v173 = vmax.f32 %v146, 0.0
  %v174 = vmax.f32 %v165, 0.0
  %v175 = vmax.f32 %v148, 0.0
  %v176 = vmax.f32 %v167, 0.0
  %v177 = vpack.c.bf16 %v171, %v169
  %v178 = vpack.c.bf16 %v172, %v170
  %v179 = vpack.c.bf16 %v175, %v173
  %v180 = vpack.c.bf16 %v176, %v174
  %v181 = vld [vmem:[%s2 + $0x10] sm:$0xf]
  %v182 = vld [vmem:[%s2 + $0x14] sm:$0xf]
  %v183 = vld [vmem:[%s2 + $0x18] sm:$0xf]
  %v184 = vld [vmem:[%s2 + $0x1c] sm:$0xf]
  %v185 = vld [vmem:[%s2 + $0x20] sm:$0xf]
  %v186 = vld [vmem:[%s2 + $0x24] sm:$0xf]
  %v187 = vld [vmem:[%s2 + $0x28] sm:$0xf]
  %v188 = vld [vmem:[%s2 + $0x2c] sm:$0xf]
  %v197 = vunpack.c.l.b16 %v181
  %v198 = vunpack.c.l.b16 %v182
  %v199 = vunpack.c.l.b16 %v183
  %v200 = vunpack.c.l.b16 %v184
  %v201 = vunpack.c.l.b16 %v185
  %v202 = vunpack.c.l.b16 %v186
  %v203 = vunpack.c.l.b16 %v187
  %v204 = vunpack.c.l.b16 %v188
  %v205 = vpack.c.b16 %v198, %v197
  %v206 = vpack.c.b16 %v200, %v199
  %v207 = vpack.c.b16 %v202, %v201
  %v208 = vpack.c.b16 %v204, %v203
  %vm209 = vcmask 261120
  %v211 = vsel %vm209, %v205, 0
  %v214 = vsel %vm209, %v206, 0
  %v217 = vsel %vm209, %v207, 0
  %v220 = vsel %vm209, %v208, 0
  %222 = vmatpush.bf16.msra.mxu0 0
  %223 = vmatpush.bf16.msra.mxu0 0
  %224 = vmatpush.bf16.msra.mxu0 0
  %225 = vmatpush.bf16.msra.mxu0 0
  %226 = vmatpush.bf16.msra.mxu0 0
  %227 = vmatpush.bf16.msra.mxu0 0
  %228 = vmatpush.bf16.msra.mxu0 %v179
  %229 = vmatpush.bf16.msra.mxu0 %v177
  %230 = vmatmul.bf16.gmra.mxu0 %v211
  %v231 = vpop.f32.mrf.mxu0
  %v232 = vadd.f32 0.0, %v231
  %v233 = vpop.f32.mrf.mxu0
  %v234 = vadd.f32 0.0, %v233
  %235 = vmatmul.bf16.gmra.mxu0 %v214
  %v236 = vpop.f32.mrf.mxu0
  %v237 = vadd.f32 0.0, %v236
  %v238 = vpop.f32.mrf.mxu0
  %v239 = vadd.f32 0.0, %v238
  %240 = vmatmul.bf16.gmra.mxu0 %v217
  %v241 = vpop.f32.mrf.mxu0
  %v242 = vadd.f32 0.0, %v241
  %v243 = vpop.f32.mrf.mxu0
  %v244 = vadd.f32 0.0, %v243
  %245 = vmatmul.bf16.gmra.mxu0 %v220
  %v246 = vpop.f32.mrf.mxu0
  %v247 = vadd.f32 0.0, %v246
  %v248 = vpop.f32.mrf.mxu0
  %v249 = vadd.f32 0.0, %v248
  %250 = vdwg.mxu0
  %251 = vmatpush.bf16.msra.mxu0 0
  %252 = vmatpush.bf16.msra.mxu0 0
  %253 = vmatpush.bf16.msra.mxu0 0
  %254 = vmatpush.bf16.msra.mxu0 0
  %255 = vmatpush.bf16.msra.mxu0 0
  %256 = vmatpush.bf16.msra.mxu0 0
  %257 = vmatpush.bf16.msra.mxu0 %v180
  %258 = vmatpush.bf16.msra.mxu0 %v178
  %259 = vmatmul.bf16.gmra.mxu0 %v211
  %v260 = vpop.f32.mrf.mxu0
  %v261 = vadd.f32 0.0, %v260
  %v262 = vpop.f32.mrf.mxu0
  %v263 = vadd.f32 0.0, %v262
  %264 = vmatmul.bf16.gmra.mxu0 %v214
  %v265 = vpop.f32.mrf.mxu0
  %v266 = vadd.f32 0.0, %v265
  %v267 = vpop.f32.mrf.mxu0
  %v268 = vadd.f32 0.0, %v267
  %269 = vmatmul.bf16.gmra.mxu0 %v217
  %v270 = vpop.f32.mrf.mxu0
  %v271 = vadd.f32 0.0, %v270
  %v272 = vpop.f32.mrf.mxu0
  %v273 = vadd.f32 0.0, %v272
  %274 = vmatmul.bf16.gmra.mxu0 %v220
  %v275 = vpop.f32.mrf.mxu0
  %v276 = vadd.f32 0.0, %v275
  %v277 = vpop.f32.mrf.mxu0
  %v278 = vadd.f32 0.0, %v277
  %279 = vdwg.mxu0
  %v280 = vpack.c.bf16 %v261, %v232
  %v281 = vpack.c.bf16 %v263, %v234
  %v282 = vpack.c.bf16 %v266, %v237
  %v283 = vpack.c.bf16 %v268, %v239
  %v284 = vpack.c.bf16 %v271, %v242
  %v285 = vpack.c.bf16 %v273, %v244
  %v286 = vpack.c.bf16 %v276, %v247
  %v287 = vpack.c.bf16 %v278, %v249
  %v288 = vld [vmem:[%s2 + $0x30] sm:$0xf]
  %v289 = vld [vmem:[%s2 + $0x34] sm:$0xf]
  %v290 = vld [vmem:[%s2 + $0x38] sm:$0xf]
  %v291 = vld [vmem:[%s2 + $0x3c] sm:$0xf]
  %v292 = vpack.c.bf16 %v15, %v15
  %v297 = vunpack.c.l.b16 %v288
  %v298 = vunpack.c.l.b16 %v289
  %v299 = vunpack.c.l.b16 %v290
  %v300 = vunpack.c.l.b16 %v291
  %v301 = vpack.c.b16 %v298, %v297
  %v302 = vpack.c.b16 %v300, %v299
  %v306 = vsel %vm209, %v292, 0
  %308 = vmatpush.bf16.msra.mxu0 0
  %309 = vmatpush.bf16.msra.mxu0 0
  %310 = vmatpush.bf16.msra.mxu0 0
  %311 = vmatpush.bf16.msra.mxu0 0
  %312 = vmatpush.bf16.msra.mxu0 0
  %313 = vmatpush.bf16.msra.mxu0 0
  %314 = vmatpush.bf16.msra.mxu0 %v302
  %315 = vmatpush.bf16.msra.mxu0 %v301
  %316 = vmatmul.bf16.gmra.mxu0 %v306
  %v317 = vpop.f32.mrf.mxu0
  %v318 = vadd.f32 0.0, %v317
  %v319 = vpop.f32.mrf.mxu0
  %320 = vdwg.mxu0
  %v321 = vpack.c.bf16 %v318, %v318
  %v326 = vunpack.c.l.b16 %v280
  %v327 = vunpack.c.h.b16 %v280
  %v328 = vunpack.c.l.b16 %v281
  %v329 = vunpack.c.h.b16 %v281
  %v330 = vunpack.c.l.b16 %v282
  %v331 = vunpack.c.h.b16 %v282
  %v332 = vunpack.c.l.b16 %v283
  %v333 = vunpack.c.h.b16 %v283
  %v334 = vpack.c.b16 %v328, %v326
  %v335 = vpack.c.b16 %v329, %v327
  %v336 = vpack.c.b16 %v332, %v330
  %v337 = vpack.c.b16 %v333, %v331
  %v343 = vsel %vm209, %v321, 0
  %345 = vmatpush.bf16.msra.mxu0 0
  %346 = vmatpush.bf16.msra.mxu0 0
  %347 = vmatpush.bf16.msra.mxu0 0
  %348 = vmatpush.bf16.msra.mxu0 0
  %349 = vmatpush.bf16.msra.mxu0 0
  %350 = vmatpush.bf16.msra.mxu0 0
  %351 = vmatpush.bf16.msra.mxu0 %v336
  %352 = vmatpush.bf16.msra.mxu0 %v334
  %353 = vmatmul.bf16.gmra.mxu0 %v343
  %v354 = vpop.f32.mrf.mxu0
  %v355 = vadd.f32 0.0, %v354
  %v356 = vpop.f32.mrf.mxu0
  %357 = vdwg.mxu0
  %358 = vmatpush.bf16.msra.mxu0 0
  %359 = vmatpush.bf16.msra.mxu0 0
  %360 = vmatpush.bf16.msra.mxu0 0
  %361 = vmatpush.bf16.msra.mxu0 0
  %362 = vmatpush.bf16.msra.mxu0 0
  %363 = vmatpush.bf16.msra.mxu0 0
  %364 = vmatpush.bf16.msra.mxu0 %v337
  %365 = vmatpush.bf16.msra.mxu0 %v335
  %366 = vmatmul.bf16.gmra.mxu0 %v343
  %v367 = vpop.f32.mrf.mxu0
  %v368 = vadd.f32 0.0, %v367
  %v369 = vpop.f32.mrf.mxu0
  %370 = vdwg.mxu0
  %v371 = vmax.f32 %v355, %v368
  %372 = vmax.xlane.f32.xlu0 %v371
  %v373 = vpop.xlane.xlu0 %372
  %v374 = vsub.f32 %v355, %v373
  %v375 = vsub.f32 %v368, %v373
  %v376 = vmul.f32 %v374, 1.442695
  %v377 = vpow.pop %v376
  %v378 = vmul.f32 %v375, 1.442695
  %v379 = vpow.pop %v378
  %v380 = vadd.f32 %v377, %v379
  %381 = vadd.xlane.f32.xlu0 %v380
  %v382 = vpop.xlane.xlu0 %381
  %v383 = vrcp.pop %v382
  %v384 = vmul.f32 %v377, %v383
  %v385 = vmul.f32 %v379, %v383
  %v386 = vpack.c.bf16 %v384, %v384
  %v387 = vpack.c.bf16 %v385, %v385
  %v392 = vunpack.c.l.b16 %v284
  %v393 = vunpack.c.h.b16 %v284
  %v394 = vunpack.c.l.b16 %v285
  %v395 = vunpack.c.h.b16 %v285
  %v396 = vunpack.c.l.b16 %v286
  %v397 = vunpack.c.h.b16 %v286
  %v398 = vunpack.c.l.b16 %v287
  %v399 = vunpack.c.h.b16 %v287
  %v400 = vpack.c.b16 %v394, %v392
  %v401 = vpack.c.b16 %v395, %v393
  %v402 = vpack.c.b16 %v398, %v396
  %v403 = vpack.c.b16 %v399, %v397
  %408 = vmatpush.bf16.xpose.msra.mxu0 0
  %409 = vmatpush.bf16.xpose.msra.mxu0 0
  %410 = vmatpush.bf16.xpose.msra.mxu0 0
  %411 = vmatpush.bf16.xpose.msra.mxu0 0
  %412 = vmatpush.bf16.xpose.msra.mxu0 0
  %413 = vmatpush.bf16.xpose.msra.mxu0 0
  %414 = vmatpush.bf16.xpose.msra.mxu0 %v402
  %415 = vmatpush.bf16.xpose.msra.mxu0 %v400
  %416 = vmatmul.bf16.gmra.mxu0 %v386
  %v417 = vpop.f32.mrf.mxu0
  %v418 = vadd.f32 %v15, %v417
  %v419 = vpop.f32.mrf.mxu0
  %420 = vdwg.mxu0
  %421 = vmatpush.bf16.xpose.msra.mxu0 0
  %422 = vmatpush.bf16.xpose.msra.mxu0 0
  %423 = vmatpush.bf16.xpose.msra.mxu0 0
  %424 = vmatpush.bf16.xpose.msra.mxu0 0
  %425 = vmatpush.bf16.xpose.msra.mxu0 0
  %426 = vmatpush.bf16.xpose.msra.mxu0 0
  %427 = vmatpush.bf16.xpose.msra.mxu0 %v403
  %428 = vmatpush.bf16.xpose.msra.mxu0 %v401
  %429 = vmatmul.bf16.gmra.mxu0 %v387
  %v430 = vpop.f32.mrf.mxu0
  %v431 = vadd.f32 %v418, %v430
  %v432 = vpop.f32.mrf.mxu0
  %433 = vdwg.mxu0
  %v434 = vpack.c.bf16 %v431, %v431
  %v435 = vperm.slane %v16, 0
  %436 = vrot.lane.b32.xlu0 %v301, 96
  %v437 = vpop.permute.xlu0 %436
  %438 = vrot.lane.b32.xlu0 %v302, 96
  %v439 = vpop.permute.xlu0 %438
  %v443 = vsel %vm209, %v434, 0
  %445 = vmatpush.bf16.msra.mxu0 0
  %446 = vmatpush.bf16.msra.mxu0 0
  %447 = vmatpush.bf16.msra.mxu0 0
  %448 = vmatpush.bf16.msra.mxu0 0
  %449 = vmatpush.bf16.msra.mxu0 0
  %450 = vmatpush.bf16.msra.mxu0 0
  %451 = vmatpush.bf16.msra.mxu0 %v439
  %452 = vmatpush.bf16.msra.mxu0 %v437
  %453 = vmatmul.bf16.gmra.mxu0 %v443
  %v454 = vpop.f32.mrf.mxu0
  %v455 = vadd.f32 %v435, %v454
  %v456 = vpop.f32.mrf.mxu0
  %457 = vdwg.mxu0
  %v458 = vmax.f32 %v455, 0.0
  %v459 = vpack.c.bf16 %v458, %v458
  %v460 = vld [vmem:[%s2 + $0x40] sm:$0xf]
  %v461 = vld [vmem:[%s2 + $0x44] sm:$0xf]
  %v462 = vld [vmem:[%s2 + $0x48] sm:$0xf]
  %v463 = vld [vmem:[%s2 + $0x4c] sm:$0xf]
  %v464 = vld [vmem:[%s2 + $0x50] sm:$0xf]
  %v465 = vld [vmem:[%s2 + $0x54] sm:$0xf]
  %v466 = vld [vmem:[%s2 + $0x58] sm:$0xf]
  %v467 = vld [vmem:[%s2 + $0x5c] sm:$0xf]
  %v468 = vperm.slane %v17, 0
  %v477 = vunpack.c.l.b16 %v460
  %v478 = vunpack.c.l.b16 %v461
  %v479 = vunpack.c.l.b16 %v462
  %v480 = vunpack.c.l.b16 %v463
  %v481 = vunpack.c.l.b16 %v464
  %v482 = vunpack.c.l.b16 %v465
  %v483 = vunpack.c.l.b16 %v466
  %v484 = vunpack.c.l.b16 %v467
  %v485 = vpack.c.b16 %v478, %v477
  %v486 = vpack.c.b16 %v480, %v479
  %v487 = vpack.c.b16 %v482, %v481
  %v488 = vpack.c.b16 %v484, %v483
  %vm493 = vcmask 523264
  %v495 = vsel %vm493, %v459, 0
  %497 = vmatpush.bf16.msra.mxu0 0
  %498 = vmatpush.bf16.msra.mxu0 0
  %499 = vmatpush.bf16.msra.mxu0 0
  %500 = vmatpush.bf16.msra.mxu0 0
  %501 = vmatpush.bf16.msra.mxu0 %v488
  %502 = vmatpush.bf16.msra.mxu0 %v487
  %503 = vmatpush.bf16.msra.mxu0 %v486
  %504 = vmatpush.bf16.msra.mxu0 %v485
  %505 = vmatmul.bf16.gmra.mxu0 %v495
  %v506 = vpop.f32.mrf.mxu0
  %v507 = vadd.f32 %v468, %v506
  %v508 = vpop.f32.mrf.mxu0
  %509 = vdwg.mxu0
  %v510 = vadd.f32 %v507, %v431
  %512 = vrot.lane.b32.xlu0 %v15, 64
  %v513 = vpop.permute.xlu0 %512
  %v515 = vmul.f32 %v510, %v513
  %v516 = vpack.c.bf16 %v515, %v515
  %v517 = vperm.slane %v18, 0
  %518 = vrot.lane.b32.xlu0 %v301, 32
  %v519 = vpop.permute.xlu0 %518
  %520 = vrot.lane.b32.xlu0 %v302, 32
  %v521 = vpop.permute.xlu0 %520
  %v525 = vsel %vm209, %v516, 0
  %527 = vmatpush.bf16.msra.mxu0 0
  %528 = vmatpush.bf16.msra.mxu0 0
  %529 = vmatpush.bf16.msra.mxu0 0
  %530 = vmatpush.bf16.msra.mxu0 0
  %531 = vmatpush.bf16.msra.mxu0 0
  %532 = vmatpush.bf16.msra.mxu0 0
  %533 = vmatpush.bf16.msra.mxu0 %v521
  %534 = vmatpush.bf16.msra.mxu0 %v519
  %535 = vmatmul.bf16.gmra.mxu0 %v525
  %v536 = vpop.f32.mrf.mxu0
  %v537 = vadd.f32 %v517, %v536
  %v538 = vpop.f32.mrf.mxu0
  %539 = vdwg.mxu0
  %540 = vrot.lane.b32.xlu0 %v15, 100
  %v541 = vpop.permute.xlu0 %540
  %v543 = vadd.f32 %v537, %v541
  %v544 = vsub.f32 0.0, %v543
  %v545 = vmul.f32 %v544, 1.442695
  %v546 = vpow.pop %v545
  %v547 = vadd.f32 %v546, 1.0
  %v548 = vrcp.pop %v547
  %v549 = vmul.f32 %v547, %v548
  %v550 = vsub.f32 1.0, %v549
  %v551 = vmul.f32 %v548, %v550
  %v552 = vadd.f32 %v548, %v551
  %vm553 = vweird.f32 %v547
  %vm554 = vweird.f32 %v548
  %vm555 = vmor %vm553, %vm554
  %v556 = vsel %vm555, %v548, %v552
  %v557 = vand.u32 2147483647, %v547
  %vm558 = vcmp.eq.f32.partialorder %v557, 8.507059e+37
  %v559 = vand.u32 %v547, 2147483648
  %v560 = vor.u32 1.1754944e-38, %v559
  %v561 = vsel %vm558, %v560, %v556
  %v562 = vmul.f32 1.0, %v561
  %564 = vrot.lane.b32.xlu0 %v515, 8
  %v565 = vpop.permute.xlu0 %564
  %vm567 = vcmask 31744
  %v568 = vsel %vm567, %v537, %v562
  %vm569 = vcmask 64512
  %v570 = vsel %vm569, %v568, %v565
  %vm571 = vcmask 326656
  %v572 = vsel %vm571, %v570, 0.0
  %573 = vst [vmem:[%s3] sm:$0xff] %v572
  // Predicated region
  $region14: #{motr_forward.1} parent=0 // pred_check
    _
  $region15: #{motr_forward.1} parent=0 // pred_check_branch
    %575 = sbr.rel (0) target = $region17
  $region16: #{motr_forward.1} parent=0 // pred_region
    _
  $region17: #{motr_forward.1} parent=0 // pred_fallthru
    _
  // Predicated region
  $region18: #{motr_forward.1} parent=0 // pred_check
    _
  $region19: #{motr_forward.1} parent=0 // pred_check_branch
    %577 = sbr.rel (0) target = $region21
  $region20: #{motr_forward.1} parent=0 // pred_region
    _
  $region21: #{motr_forward.1} parent=0 // pred_fallthru
    _

</llo_original>
